<compile_context>
chip_gen: v7x
topology: tpu7x:2x2x1
jax: 0.10.0
libtpu: 0.0.40
codegen_flags: <defaults>
</compile_context>

<pallas_src>
import functools
import math

import jax
import jax.numpy as jnp
from jax.experimental import pallas as pl
from jax.experimental.pallas import tpu as pltpu

LANES = 128
SUBLANES = 8
MAX_BLOCK_ROWS = 4096            # 4096 x 128 x 4B = 2 MiB per f32 input block
TARGET_MIN_BLOCKS = 4            # aim for a few grid steps -> DMA/compute overlap
VMEM_LIMIT_BYTES = 32 * 1024 * 1024


def _round_up(x, m):
    return (x + m - 1) // m * m


def _wt_bce_kernel(o_ref, t_ref, acc0_ref, acc1_ref, *, tail_valid, needs_mask):
    """Accumulate the two unweighted partial sums over (8,128) accumulators:
         acc0 += sum(t * log(o))        acc1 += sum((1 - t) * log(1 - o))
    Weights / negation / mean are applied on the tiny partials in the wrapper.
    """
    i = pl.program_id(0)

    @pl.when(i == 0)
    def _():
        acc0_ref[...] = jnp.zeros_like(acc0_ref)
        acc1_ref[...] = jnp.zeros_like(acc1_ref)

    o = o_ref[...].astype(jnp.float32)
    t = t_ref[...].astype(jnp.float32)

    term0 = t * jnp.log(o)
    term1 = (1.0 - t) * jnp.log(1.0 - o)

    def _accum(t0, t1):
        # (block_rows, 128) -> (block_rows/8, 8, 128) -> VALU add tree -> (8, 128)
        acc0_ref[...] += t0.reshape(-1, SUBLANES, LANES).sum(axis=0)
        acc1_ref[...] += t1.reshape(-1, SUBLANES, LANES).sum(axis=0)

    if needs_mask:
        is_last = i == pl.num_programs(0) - 1

        @pl.when(jnp.logical_not(is_last))
        def _():
            _accum(term0, term1)

        @pl.when(is_last)
        def _():
            # Mask only the ragged tail of the final block (block-local index,
            # so no int32 overflow for huge tensors).  where-SELECT (not a
            # multiply-by-mask) so NaN/Inf from padding / overhang rows are
            # dropped cleanly.
            row = jax.lax.broadcasted_iota(jnp.int32, term0.shape, 0)
            col = jax.lax.broadcasted_iota(jnp.int32, term0.shape, 1)
            valid = (row * LANES + col) < tail_valid
            _accum(jnp.where(valid, term0, 0.0), jnp.where(valid, term1, 0.0))
    else:
        _accum(term0, term1)


def wt_bce_loss(wts, output, target):
    """Pallas implementation of WtBCELoss.forward(output, target)."""
    assert output.shape == target.shape
    total = int(math.prod(output.shape))
    assert total > 0

    rows = pl.cdiv(total, LANES)

    if total % LANES == 0:
        # Common NCHW case: reshape of a contiguous array is free (no HBM copy).
        o_2d = output.reshape(rows, LANES)
        t_2d = target.reshape(rows, LANES)
    else:
        # Ragged tail (< 128 elems): pad the flat view up to whole lane rows.
        # TODO(synk): jnp.pad materializes an HBM copy of both inputs; a manual
        # DMA tail block (memory_space=pl.ANY) would avoid it for large ragged
        # shapes.  The masked final block below ignores the padded elements.
        pad = rows * LANES - total
        pad_o = 0.5 if jnp.issubdtype(output.dtype, jnp.floating) else 0
        o_2d = jnp.pad(output.reshape(-1), (0, pad),
                       constant_values=pad_o).reshape(rows, LANES)
        t_2d = jnp.pad(target.reshape(-1), (0, pad),
                       constant_values=0).reshape(rows, LANES)

    # Dtype-aware row alignment: keep blocks on native sublane-tile boundaries
    # (f32 -> 8 rows, bf16 -> 16, int8/fp8/bool -> 32).
    def _row_align(dt):
        return max(SUBLANES, 32 // max(1, jnp.dtype(dt).itemsize))
    row_align = max(_row_align(output.dtype), _row_align(target.dtype))

    # Block size: as large as possible (up to 2 MiB/input) while keeping a few
    # grid steps for pipeline overlap.  No divisibility requirement: grid is
    # cdiv and the last block is masked in-kernel.
    block_rows = _round_up(pl.cdiv(rows, TARGET_MIN_BLOCKS), row_align)
    block_rows = max(row_align, min(MAX_BLOCK_ROWS, block_rows))

    n_blocks = pl.cdiv(rows, block_rows)
    block_elems = block_rows * LANES
    tail_valid = total - (n_blocks - 1) * block_elems
    needs_mask = (n_blocks * block_elems) != total

    kernel = functools.partial(_wt_bce_kernel,
                               tail_valid=tail_valid, needs_mask=needs_mask)

    p0, p1 = pl.pallas_call(
        kernel,
        out_shape=(jax.ShapeDtypeStruct((SUBLANES, LANES), jnp.float32),
                   jax.ShapeDtypeStruct((SUBLANES, LANES), jnp.float32)),
        grid_spec=pltpu.PrefetchScalarGridSpec(
            num_scalar_prefetch=0,
            grid=(n_blocks,),
            in_specs=[
                pl.BlockSpec((block_rows, LANES), lambda i: (i, 0)),
                pl.BlockSpec((block_rows, LANES), lambda i: (i, 0)),
            ],
            out_specs=[
                pl.BlockSpec((SUBLANES, LANES), lambda i: (0, 0)),
                pl.BlockSpec((SUBLANES, LANES), lambda i: (0, 0)),
            ],
        ),
        compiler_params=pltpu.CompilerParams(
            dimension_semantics=("arbitrary",),
            vmem_limit_bytes=VMEM_LIMIT_BYTES),
    )(o_2d, t_2d)

    wts_f32 = jnp.asarray(wts, jnp.float32)
    # Tiny (8,128) final reductions + weighting + negate + mean in plain XLA.
    loss_sum = wts_f32[0] * jnp.sum(p0) + wts_f32[1] * jnp.sum(p1)
    return -(loss_sum / jnp.float32(total))


def wt_bce_loss_ref(wts, output, target):
    wts = wts.astype(jnp.float32)
    o = output.astype(jnp.float32)
    t = target.astype(jnp.float32)
    loss = wts[0] * (t * jnp.log(o)) + wts[1] * ((1.0 - t) * jnp.log(1.0 - o))
    return -jnp.mean(loss)


def _check(wts, output, target, rtol, atol):
    loss = wt_bce_loss(wts, output, target)
    jax.block_until_ready(loss)
    ref = wt_bce_loss_ref(wts, output, target)
    assert jnp.allclose(loss, ref, rtol=rtol, atol=atol), (loss, ref)


if __name__ == "__main__":
    key = jax.random.PRNGKey(0)
    k1, k2, k3, k4, k5, k6 = jax.random.split(key, 6)

    # Deterministic class weights (the module's __init__ just stores wts.float()).
    wts = jnp.array([0.3, 0.7], dtype=jnp.float32)

    # Case 1: small NCHW, lane-aligned fast path (no masking, 2 grid steps).
    B, C, H, W = 2, 4, 16, 16
    out1 = jax.nn.sigmoid(jax.random.normal(k1, (B, C, H, W), jnp.float32))
    tgt1 = jax.random.bernoulli(k2, 0.5, (B, C, H, W)).astype(jnp.float32)
    _check(wts, out1, tgt1, rtol=1e-5, atol=1e-6)

    # Case 2: ragged shape -> minimal lane pad + masked final block.
    out2 = jax.nn.sigmoid(jax.random.normal(k3, (3, 5, 7, 11), jnp.float32))
    tgt2 = jax.random.bernoulli(k4, 0.5, (3, 5, 7, 11)).astype(jnp.float32)
    _check(wts, out2, tgt2, rtol=1e-5, atol=1e-6)

    # Case 3: larger tensor -> multiple blocks, no masking, pipelined streaming.
    out3 = jax.nn.sigmoid(jax.random.normal(k5, (4, 4, 128, 128), jnp.float32))
    tgt3 = jax.random.bernoulli(k6, 0.5, (4, 4, 128, 128)).astype(jnp.float32)
    _check(wts, out3, tgt3, rtol=1e-4, atol=1e-6)

    print("KERNEL_OK")
</pallas_src>

<mosaic_0001>
module attributes {stable_mosaic.version = 11 : i64} {
  func.func @_wt_bce_kernel(%arg0: i32, %arg1: memref<8x128xf32, #tpu.memory_space<vmem>>, %arg2: memref<8x128xf32, #tpu.memory_space<vmem>>, %arg3: memref<8x128xf32, #tpu.memory_space<vmem>>, %arg4: memref<8x128xf32, #tpu.memory_space<vmem>>) attributes {dimension_semantics = [#tpu.dimension_semantics<arbitrary>], iteration_bounds = array<i64: 2>, scalar_prefetch = 0 : i64, scratch_operands = 0 : i64, tpu.core_type = #tpu.core_type<tc>, window_params = [{transform_indices = @transform_0, window_bounds = array<i64: 8, 128>}, {transform_indices = @transform_1, window_bounds = array<i64: 8, 128>}, {pipeline_mode = #tpu.pipeline_mode<synchronous>, transform_indices = @transform_2, window_bounds = array<i64: 8, 128>}, {pipeline_mode = #tpu.pipeline_mode<synchronous>, transform_indices = @transform_3, window_bounds = array<i64: 8, 128>}]} {
    %c0_i32 = arith.constant 0 : i32
    %0 = arith.cmpi eq, %arg0, %c0_i32 : i32
    %1 = arith.extui %0 : i1 to i32
    %c0_i32_0 = arith.constant 0 : i32
    %2 = arith.cmpi ne, %1, %c0_i32_0 : i32
    scf.if %2 {
      %cst_15 = arith.constant 0.000000e+00 : f32
      %23 = vector.broadcast %cst_15 : f32 to vector<8x128xf32>
      %c0_16 = arith.constant 0 : index
      %c0_17 = arith.constant 0 : index
      %24 = vector.load %arg3[%c0_16, %c0_17] : memref<8x128xf32, #tpu.memory_space<vmem>>, vector<8x128xf32>
      tpu.vector_store %arg3[%c0_16, %c0_17], %23 {strides = array<i32>} : memref<8x128xf32, #tpu.memory_space<vmem>>, vector<8x128xf32>,
      %cst_18 = arith.constant 0.000000e+00 : f32
      %25 = vector.broadcast %cst_18 : f32 to vector<8x128xf32>
      %c0_19 = arith.constant 0 : index
      %c0_20 = arith.constant 0 : index
      %26 = vector.load %arg4[%c0_19, %c0_20] : memref<8x128xf32, #tpu.memory_space<vmem>>, vector<8x128xf32>
      tpu.vector_store %arg4[%c0_19, %c0_20], %25 {strides = array<i32>} : memref<8x128xf32, #tpu.memory_space<vmem>>, vector<8x128xf32>,
    } else {
    }
    %c0 = arith.constant 0 : index
    %c0_1 = arith.constant 0 : index
    %3 = vector.load %arg1[%c0, %c0_1] : memref<8x128xf32, #tpu.memory_space<vmem>>, vector<8x128xf32>
    %c0_2 = arith.constant 0 : index
    %c0_3 = arith.constant 0 : index
    %4 = vector.load %arg2[%c0_2, %c0_3] : memref<8x128xf32, #tpu.memory_space<vmem>>, vector<8x128xf32>
    %5 = math.log %3 : vector<8x128xf32>
    %6 = arith.mulf %4, %5 : vector<8x128xf32>
    %cst = arith.constant 1.000000e+00 : f32
    %7 = vector.broadcast %cst : f32 to vector<8x128xf32>
    %8 = arith.subf %7, %4 : vector<8x128xf32>
    %cst_4 = arith.constant 1.000000e+00 : f32
    %9 = vector.broadcast %cst_4 : f32 to vector<8x128xf32>
    %10 = arith.subf %9, %3 : vector<8x128xf32>
    %11 = math.log %10 : vector<8x128xf32>
    %12 = arith.mulf %8, %11 : vector<8x128xf32>
    %c0_5 = arith.constant 0 : index
    %c0_6 = arith.constant 0 : index
    %13 = vector.load %arg3[%c0_5, %c0_6] : memref<8x128xf32, #tpu.memory_space<vmem>>, vector<8x128xf32>
    %14 = vector.shape_cast %6 : vector<8x128xf32> to vector<1x8x128xf32>
    %cst_7 = arith.constant dense<0.000000e+00> : vector<8x128xf32>
    %15 = vector.multi_reduction <add>, %14, %cst_7 [0] : vector<1x8x128xf32> to vector<8x128xf32>
    %16 = arith.addf %13, %15 : vector<8x128xf32>
    %c0_8 = arith.constant 0 : index
    %c0_9 = arith.constant 0 : index
    %17 = vector.load %arg3[%c0_8, %c0_9] : memref<8x128xf32, #tpu.memory_space<vmem>>, vector<8x128xf32>
    tpu.vector_store %arg3[%c0_8, %c0_9], %16 {strides = array<i32>} : memref<8x128xf32, #tpu.memory_space<vmem>>, vector<8x128xf32>,
    %c0_10 = arith.constant 0 : index
    %c0_11 = arith.constant 0 : index
    %18 = vector.load %arg4[%c0_10, %c0_11] : memref<8x128xf32, #tpu.memory_space<vmem>>, vector<8x128xf32>
    %19 = vector.shape_cast %12 : vector<8x128xf32> to vector<1x8x128xf32>
    %cst_12 = arith.constant dense<0.000000e+00> : vector<8x128xf32>
    %20 = vector.multi_reduction <add>, %19, %cst_12 [0] : vector<1x8x128xf32> to vector<8x128xf32>
    %21 = arith.addf %18, %20 : vector<8x128xf32>
    %c0_13 = arith.constant 0 : index
    %c0_14 = arith.constant 0 : index
    %22 = vector.load %arg4[%c0_13, %c0_14] : memref<8x128xf32, #tpu.memory_space<vmem>>, vector<8x128xf32>
    tpu.vector_store %arg4[%c0_13, %c0_14], %21 {strides = array<i32>} : memref<8x128xf32, #tpu.memory_space<vmem>>, vector<8x128xf32>,
    return
  }
  func.func @transform_0(%arg0: i32) -> (i32, i32) {
    %c0_i32 = arith.constant 0 : i32
    %c0_i32_0 = arith.constant 0 : i32
    return %arg0, %c0_i32 : i32, i32
  }
  func.func @transform_1(%arg0: i32) -> (i32, i32) {
    %c0_i32 = arith.constant 0 : i32
    %c0_i32_0 = arith.constant 0 : i32
    return %arg0, %c0_i32 : i32, i32
  }
  func.func @transform_2(%arg0: i32) -> (i32, i32) {
    %c0_i32 = arith.constant 0 : i32
    %c0_i32_0 = arith.constant 0 : i32
    %c0_i32_1 = arith.constant 0 : i32
    return %c0_i32, %c0_i32_0 : i32, i32
  }
  func.func @transform_3(%arg0: i32) -> (i32, i32) {
    %c0_i32 = arith.constant 0 : i32
    %c0_i32_0 = arith.constant 0 : i32
    %c0_i32_1 = arith.constant 0 : i32
    return %c0_i32, %c0_i32_0 : i32, i32
  }
}

</mosaic_0001>

<llo_original>
// kernel: tpu_custom_call.1
$region0: #{tpu_custom_call.1}
  #allocation0 [shape = 'u32[]', space=smem, size = 0x4, offset = 0x4, fixed_abs, tag = 'smem constant byte address 0x4 - core index']
  #allocation1 [shape = 'u32[144,128]{1,0:T(1,128)}', space=vmem, size = 0x12000, scoped, tag = 'internal scratch']
  %s0 = inlined_call_operand.hbm [shape: f32[16,128], index: 0, kind: input, shape index: {}]
  %s1 = inlined_call_operand.hbm [shape: f32[16,128], index: 1, kind: input, shape index: {}]
  %s2 = inlined_call_operand.hbm [shape: f32[8,128], index: 2, kind: output, shape index: {0}]
  %s3 = inlined_call_operand.hbm [shape: f32[8,128], index: 3, kind: output, shape index: {1}]
  %4 = xla_tuple %s2, %s3
  %s5 = sld [smem:[#allocation0]]
  $region61: #{tpu_custom_call.1} parent=0
    _
  %s7 = ssub.s32 1, %s5
  %s8 = scalar_select 0, %s7, %s5
  $region1: #{tpu_custom_call.1} parent=0
    #allocation2 [shape = 'u8[8192]{0}', space=vmem, size = 0x2000, scoped, tag = 'input window, operand 0']
    #allocation3 [shape = 's32[2]{0}', space=sflag, size = 0x8, scoped, tag = 'scoped memory for tpu_custom_call.1']
    #allocation4 [shape = 's32[2]{0}', space=sflag, size = 0x8, scoped, tag = 'scoped memory for tpu_custom_call.1']
    #allocation5 [shape = 'u8[8192]{0}', space=vmem, size = 0x2000, scoped, tag = 'input window, operand 1']
    #allocation6 [shape = 's32[2]{0}', space=sflag, size = 0x8, scoped, tag = 'scoped memory for tpu_custom_call.1']
    #allocation7 [shape = 'u8[4096]{0}', space=vmem, size = 0x1000, scoped, tag = 'output window, operand 0, single buffered']
    #allocation8 [shape = 'u8[4096]{0}', space=vmem, size = 0x1000, scoped, tag = 'output window, operand 1, single buffered']
    #allocation9 [shape = 's32[1]{0}', space=sflag, size = 0x4, scoped, tag = 'scoped memory for tpu_custom_call.1']
    %9 = vsyncpa [#allocation3], 0
    %s10 = scalar_lea.sflag [#allocation3], 1
    %11 = vsyncpa %s10, 0
    %12 = vsyncpa [#allocation6], 0
    %s13 = scalar_lea.sflag [#allocation6], 1
    %14 = vsyncpa %s13, 0
    %15 = vsyncpa [#allocation4], 0
    %16 = vsyncpa [#allocation9], 0
    loop: start=0, step=1, limit=4
    $region2: #{tpu_custom_call.1} parent=1 // loop_pre_header
      _
    $region3: #{tpu_custom_call.1} parent=1 // loop_header
      %s18 = sphi 0, %s22
      %p19 = scmp.ge.s32.totalorder %s18, 4
      %s28 = sphi 0, %s30
      %s31 = sphi 0, %s28
      %s32 = sphi 0, %s31
      %s48 = sphi 0, %s32
      %s54 = sphi 0, %s56
      %s57 = sphi 0, %s54
      %s58 = sphi 0, %s57
      %s74 = sphi 0, %s58
      %s78 = sphi 0, %s78
      %s80 = sphi 0, %s78
      %s81 = sphi 0, %s80
      %s95 = sphi 0, %s81
      %s99 = sphi 0, %s99
      %s101 = sphi 0, %s99
      %s102 = sphi 0, %s101
      %s116 = sphi 0, %s102
    $region4: #{tpu_custom_call.1} parent=1 // loop_header_branch
      %21 = sbr.rel (%p19) target = $region8
    $region5: #{tpu_custom_call.1} parent=1 // loop_body
      %s23 = ssub.s32 %s18, 1
      %s24 = ssub.s32 %s18, 2
      %s25 = sadd.s32 %s18, 1
      %s26 = ssub.s32 %s18, %s25
      %p27 = scmp.eq.s32.totalorder %s26, 0
      %s29 = sadd.s32 %s28, 1
      %s30 = scalar_select %p27, %s28, %s29
      %p33 = pneg %p27
      %p34 = scmp.eq.s32.totalorder %s18, 1
      %p35 = por %p33, %p34
      %p36 = scmp.ne.s32.totalorder %s28, %s31
      %p37 = scmp.eq.s32.totalorder %s18, 0
      %p38 = por %p36, %p37
      %p39 = scmp.ne.s32.totalorder %s28, %s31
      %p40 = scmp.eq.s32.totalorder %s23, 1
      %p41 = por %p39, %p40
      %p42 = scmp.ne.s32.totalorder %s31, %s32
      %p43 = scmp.eq.s32.totalorder %s23, 0
      %p44 = por %p42, %p43
      %p45 = scmp.ne.s32.totalorder %s31, %s32
      %p46 = scmp.eq.s32.totalorder %s24, 1
      %p47 = por %p45, %p46
      %p49 = scmp.ne.s32.totalorder %s32, %s48
      %p50 = scmp.eq.s32.totalorder %s24, 0
      %p51 = por %p49, %p50
      %s52 = ssub.s32 %s18, %s25
      %p53 = scmp.eq.s32.totalorder %s52, 0
      %s55 = sadd.s32 %s54, 1
      %s56 = scalar_select %p53, %s54, %s55
      %p59 = pneg %p53
      %p60 = scmp.eq.s32.totalorder %s18, 1
      %p61 = por %p59, %p60
      %p62 = scmp.ne.s32.totalorder %s54, %s57
      %p63 = scmp.eq.s32.totalorder %s18, 0
      %p64 = por %p62, %p63
      %p65 = scmp.ne.s32.totalorder %s54, %s57
      %p66 = scmp.eq.s32.totalorder %s23, 1
      %p67 = por %p65, %p66
      %p68 = scmp.ne.s32.totalorder %s57, %s58
      %p69 = scmp.eq.s32.totalorder %s23, 0
      %p70 = por %p68, %p69
      %p71 = scmp.ne.s32.totalorder %s57, %s58
      %p72 = scmp.eq.s32.totalorder %s24, 1
      %p73 = por %p71, %p72
      %p75 = scmp.ne.s32.totalorder %s58, %s74
      %p76 = scmp.eq.s32.totalorder %s24, 0
      %p77 = por %p75, %p76
      %s79 = sadd.s32 %s78, 1
      %p82 = scmp.eq.s32.totalorder %s18, 1
      %p83 = scmp.ne.s32.totalorder %s78, %s80
      %p84 = scmp.eq.s32.totalorder %s18, 0
      %p85 = por %p83, %p84
      %p86 = scmp.ne.s32.totalorder %s78, %s80
      %p87 = scmp.eq.s32.totalorder %s23, 1
      %p88 = por %p86, %p87
      %p89 = scmp.ne.s32.totalorder %s80, %s81
      %p90 = scmp.eq.s32.totalorder %s23, 0
      %p91 = por %p89, %p90
      %p92 = scmp.ne.s32.totalorder %s80, %s81
      %p93 = scmp.eq.s32.totalorder %s24, 1
      %p94 = por %p92, %p93
      %p96 = scmp.ne.s32.totalorder %s81, %s95
      %p97 = scmp.eq.s32.totalorder %s24, 0
      %p98 = por %p96, %p97
      %s100 = sadd.s32 %s99, 1
      %p103 = scmp.eq.s32.totalorder %s18, 1
      %p104 = scmp.ne.s32.totalorder %s99, %s101
      %p105 = scmp.eq.s32.totalorder %s18, 0
      %p106 = por %p104, %p105
      %p107 = scmp.ne.s32.totalorder %s99, %s101
      %p108 = scmp.eq.s32.totalorder %s23, 1
      %p109 = por %p107, %p108
      %p110 = scmp.ne.s32.totalorder %s101, %s102
      %p111 = scmp.eq.s32.totalorder %s23, 0
      %p112 = por %p110, %p111
      %p113 = scmp.ne.s32.totalorder %s101, %s102
      %p114 = scmp.eq.s32.totalorder %s24, 1
      %p115 = por %p113, %p114
      %p117 = scmp.ne.s32.totalorder %s102, %s116
      %p118 = scmp.eq.s32.totalorder %s24, 0
      %p119 = por %p117, %p118
      %p120 = scmp.le.s32.totalorder 1, %s18
      %p121 = scmp.lt.s32.totalorder %s18, 3
      %p122 = pnand %p120, %p121
      %p123 = pneg %p122
      // Predicated region
      $region9: #{tpu_custom_call.1} parent=5 // pred_check
        _
      $region10: #{tpu_custom_call.1} parent=5 // pred_check_branch
        %125 = sbr.rel (%p122) target = $region12
      $region11: #{tpu_custom_call.1} parent=5 // pred_region
        %s126 = ssub.s32 %s18, 1
      $region12: #{tpu_custom_call.1} parent=5 // pred_fallthru
        _
      %p127 = scmp.lt.s32.totalorder %s18, 2
      // Predicated region
      $region13: #{tpu_custom_call.1} parent=5 // pred_check
        %p128 = pneg %p127
      $region14: #{tpu_custom_call.1} parent=5 // pred_check_branch
        %130 = sbr.rel (%p128) target = $region16
      $region15: #{tpu_custom_call.1} parent=5 // pred_region
        // Predicated region
        $region17: #{tpu_custom_call.1} parent=15 // pred_check
          %p131 = pneg %p38
        $region18: #{tpu_custom_call.1} parent=15 // pred_check_branch
          %133 = sbr.rel (%p131) target = $region20
        $region19: #{tpu_custom_call.1} parent=15 // pred_region
          %s134 = sand.u32 %s28, 1
          %s135 = scalar_lea.sflag [#allocation3], %s134
          %s136 = sand.u32 %s28, 1
          %s137 = smul.addr %s136, 8
          %s138 = scalar_lea.vmem [#allocation2], %s137
          %s140 = ssub.s32 128, 128
          %141 = vsyncadd %s135, %s140
          %s142 = smul.addr %s18, 128
          %s143 = scalar_lea.hbm %s0, %s142
          %s145 = sshll.u32 %s138, 4
          %s146 = int_to_ptr.vmem [resolvable:$true] %s145
          %148 = dma.hbm_to_vmem [thread:$0]  %s143, 128, %s146, %s135
        $region20: #{tpu_custom_call.1} parent=15 // pred_fallthru
          _
        // Predicated region
        $region21: #{tpu_custom_call.1} parent=15 // pred_check
          %p149 = pneg %p64
        $region22: #{tpu_custom_call.1} parent=15 // pred_check_branch
          %151 = sbr.rel (%p149) target = $region24
        $region23: #{tpu_custom_call.1} parent=15 // pred_region
          %s152 = sand.u32 %s54, 1
          %s153 = scalar_lea.sflag [#allocation6], %s152
          %s154 = sand.u32 %s54, 1
          %s155 = smul.addr %s154, 8
          %s156 = scalar_lea.vmem [#allocation5], %s155
          %s158 = ssub.s32 128, 128
          %159 = vsyncadd %s153, %s158
          %s160 = smul.addr %s18, 128
          %s161 = scalar_lea.hbm %s1, %s160
          %s163 = sshll.u32 %s156, 4
          %s164 = int_to_ptr.vmem [resolvable:$true] %s163
          %166 = dma.hbm_to_vmem [thread:$0]  %s161, 128, %s164, %s153
        $region24: #{tpu_custom_call.1} parent=15 // pred_fallthru
          _
      $region16: #{tpu_custom_call.1} parent=5 // pred_fallthru
        _
      %p167 = scmp.le.s32.totalorder 1, %s18
      %p168 = scmp.lt.s32.totalorder %s18, 3
      %p169 = pnand %p167, %p168
      %p170 = pneg %p169
      // Predicated region
      $region25: #{tpu_custom_call.1} parent=5 // pred_check
        _
      $region26: #{tpu_custom_call.1} parent=5 // pred_check_branch
        %172 = sbr.rel (%p169) target = $region28
      $region27: #{tpu_custom_call.1} parent=5 // pred_region
        %s173 = ssub.s32 %s18, 1
        %s174 = sand.u32 %s31, 1
        %s175 = scalar_lea.sflag [#allocation3], %s174
        %s176 = sand.u32 %s31, 1
        %s177 = smul.addr %s176, 8
        %s178 = scalar_lea.vmem [#allocation2], %s177
        // Predicated region
        $region29: #{tpu_custom_call.1} parent=27 // pred_check
          %p179 = pneg %p44
        $region30: #{tpu_custom_call.1} parent=27 // pred_check_branch
          %181 = sbr.rel (%p179) target = $region32
        $region31: #{tpu_custom_call.1} parent=27 // pred_region
          %182 = dma.done %s175, 128
        $region32: #{tpu_custom_call.1} parent=27 // pred_fallthru
          _
        %s183 = sand.u32 %s57, 1
        %s184 = scalar_lea.sflag [#allocation6], %s183
        %s185 = sand.u32 %s57, 1
        %s186 = smul.addr %s185, 8
        %s187 = scalar_lea.vmem [#allocation5], %s186
        // Predicated region
        $region33: #{tpu_custom_call.1} parent=27 // pred_check
          %p188 = pneg %p70
        $region34: #{tpu_custom_call.1} parent=27 // pred_check_branch
          %190 = sbr.rel (%p188) target = $region36
        $region35: #{tpu_custom_call.1} parent=27 // pred_region
          %191 = dma.done %s184, 128
        $region36: #{tpu_custom_call.1} parent=27 // pred_fallthru
          _
        %s192 = sand.u32 %s31, 1
        %s193 = scalar_lea.sflag [#allocation3], %s192
        %s194 = sand.u32 %s31, 1
        %s195 = smul.addr %s194, 8
        %s196 = scalar_lea.vmem [#allocation2], %s195
        %p197 = pneg %p44
        %p198 = pneg %p41
        %s199 = sand.u32 %s57, 1
        %s200 = scalar_lea.sflag [#allocation6], %s199
        %s201 = sand.u32 %s57, 1
        %s202 = smul.addr %s201, 8
        %s203 = scalar_lea.vmem [#allocation5], %s202
        %p204 = pneg %p70
        %p205 = pneg %p67
        %p206 = pneg %p91
        %p207 = pneg %p88
        %p208 = pneg %p112
        %p209 = pneg %p109
        %p210 = scmp.eq.s32.totalorder %s23, 0
        // Predicated region
        $region37: #{tpu_custom_call.1} parent=27 // pred_check
          %p211 = pneg %p210
        $region38: #{tpu_custom_call.1} parent=27 // pred_check_branch
          %213 = sbr.rel (%p211) target = $region40
        $region39: #{tpu_custom_call.1} parent=27 // pred_region
          %214 = vst [vmem:[#allocation7] sm:$0xff] 0.0
          %215 = vst [vmem:[#allocation8] sm:$0xff] 0.0
        $region40: #{tpu_custom_call.1} parent=27 // pred_fallthru
          _
        %v216 = vld [vmem:[%s178] sm:$0xff]
        %v217 = vld [vmem:[%s187] sm:$0xff]
        %v218 = vlog2.pop %v216
        %v219 = vmul.f32 %v218, 0.6931472
        %v220 = vmul.f32 %v217, %v219
        %v221 = vsub.f32 1.0, %v217
        %v222 = vsub.f32 1.0, %v216
        %v223 = vlog2.pop %v222
        %v224 = vmul.f32 %v223, 0.6931472
        %v225 = vmul.f32 %v221, %v224
        %v226 = vld [vmem:[#allocation7] sm:$0xff]
        %v227 = vadd.f32 %v220, 0.0
        %v228 = vadd.f32 %v226, %v227
        %229 = vst [vmem:[#allocation7] sm:$0xff] %v228
        %v230 = vld [vmem:[#allocation8] sm:$0xff]
        %v231 = vadd.f32 %v225, 0.0
        %v232 = vadd.f32 %v230, %v231
        %233 = vst [vmem:[#allocation8] sm:$0xff] %v232
        // Predicated region
        $region41: #{tpu_custom_call.1} parent=27 // pred_check
          %p234 = pneg %p88
        $region42: #{tpu_custom_call.1} parent=27 // pred_check_branch
          %236 = sbr.rel (%p234) target = $region44
        $region43: #{tpu_custom_call.1} parent=27 // pred_region
          %s238 = ssub.s32 128, 128
          %239 = vsyncadd [#allocation4], %s238
          %s241 = sshll.u32 [#allocation7], 4
          %s242 = int_to_ptr.vmem [resolvable:$true] %s241
          %244 = dma.vmem_to_hbm [thread:$0]  %s242, 128, %s2, [#allocation4]
        $region44: #{tpu_custom_call.1} parent=27 // pred_fallthru
          _
        // Predicated region
        $region45: #{tpu_custom_call.1} parent=27 // pred_check
          %p245 = pneg %p109
        $region46: #{tpu_custom_call.1} parent=27 // pred_check_branch
          %247 = sbr.rel (%p245) target = $region48
        $region47: #{tpu_custom_call.1} parent=27 // pred_region
          %s249 = ssub.s32 128, 128
          %250 = vsyncadd [#allocation9], %s249
          %s252 = sshll.u32 [#allocation8], 4
          %s253 = int_to_ptr.vmem [resolvable:$true] %s252
          %255 = dma.vmem_to_hbm [thread:$0]  %s253, 128, %s3, [#allocation9]
        $region48: #{tpu_custom_call.1} parent=27 // pred_fallthru
          _
        // Predicated region
        $region49: #{tpu_custom_call.1} parent=27 // pred_check
          %p256 = pneg %p88
        $region50: #{tpu_custom_call.1} parent=27 // pred_check_branch
          %258 = sbr.rel (%p256) target = $region52
        $region51: #{tpu_custom_call.1} parent=27 // pred_region
          %259 = dma.done [#allocation4], 128
        $region52: #{tpu_custom_call.1} parent=27 // pred_fallthru
          _
        // Predicated region
        $region53: #{tpu_custom_call.1} parent=27 // pred_check
          %p260 = pneg %p109
        $region54: #{tpu_custom_call.1} parent=27 // pred_check_branch
          %262 = sbr.rel (%p260) target = $region56
        $region55: #{tpu_custom_call.1} parent=27 // pred_region
          %263 = dma.done [#allocation9], 128
        $region56: #{tpu_custom_call.1} parent=27 // pred_fallthru
          _
      $region28: #{tpu_custom_call.1} parent=5 // pred_fallthru
        _
      %p264 = scmp.le.s32.totalorder 2, %s18
      // Predicated region
      $region57: #{tpu_custom_call.1} parent=5 // pred_check
        %p265 = pneg %p264
      $region58: #{tpu_custom_call.1} parent=5 // pred_check_branch
        %267 = sbr.rel (%p265) target = $region60
      $region59: #{tpu_custom_call.1} parent=5 // pred_region
        %s268 = ssub.s32 %s18, 2
      $region60: #{tpu_custom_call.1} parent=5 // pred_fallthru
        _
    $region6: #{tpu_custom_call.1} parent=1 // loop_footer
      %s22 = sadd.s32 1, %s18
    $region7: #{tpu_custom_call.1} parent=1 // loop_footer_branch
      %17 = sbr.rel target = $region3
    $region8: #{tpu_custom_call.1} parent=1 // loop_exit
      _
    %269 = vsyncpa [#allocation3], 1
    %s270 = scalar_lea.sflag [#allocation3], 1
    %271 = vsyncpa %s270, 1
    %272 = vsyncpa [#allocation6], 1
    %s273 = scalar_lea.sflag [#allocation6], 1
    %274 = vsyncpa %s273, 1
    %275 = vsyncpa [#allocation4], 1
    %s276 = scalar_lea.sflag [#allocation4], 1
    %277 = vsyncpa %s276, 1
    %278 = vsyncpa [#allocation9], 1

</llo_original>
